<compile_context>
chip_gen: v7x
topology: tpu7x:2x2x1
jax: 0.10.0
libtpu: 0.0.40
codegen_flags: <defaults>
</compile_context>

<pallas_src>
import jax
import jax.numpy as jnp
from jax import lax
from jax.experimental import pallas as pl
from jax.experimental.pallas import tpu as pltpu


def _round_up(x, m):
    return ((x + m - 1) // m) * m


def _critic_kernel(sa_ref, w1_ref, b1_ref, w2_ref, b2_ref, w3_ref, b3_ref, o_ref):
    # Layer 1: single fused [state|action] matmul, f32 accumulation.
    h1 = jnp.dot(sa_ref[...], w1_ref[...], preferred_element_type=jnp.float32)
    h1 = jnp.maximum(h1 + b1_ref[...], 0.0)

    # Layer 2: bf16 MXU matmul, f32 accumulation.
    h2 = jnp.dot(h1.astype(w2_ref.dtype), w2_ref[...],
                 preferred_element_type=jnp.float32)
    h2 = jnp.maximum(h2 + b2_ref[...], 0.0)

    # Layer 3 (256 -> 1): MXU dot_general with w3 (1, 256) as LHS, contracting
    # the feature axis of both operands -> (1, TILE_B) already lane-major.
    q = lax.dot_general(w3_ref[...], h2.astype(w3_ref.dtype),
                        dimension_numbers=(((1,), (1,)), ((), ())),
                        preferred_element_type=jnp.float32)          # (1, TILE_B)
    q = q + b3_ref[0, 0]                                              # SMEM scalar bias
    o_ref[...] = q.reshape(o_ref.shape).astype(o_ref.dtype)          # layout-free (1,1,TILE_B)


def critic_forward(state, action, params, *, tile_b=512):
    """state: (B, state_dim), action: (B, action_dim) -> (B, 1) float32."""
    w1, b1, w2, b2, w3, b3 = params
    B = state.shape[0]

    # Tile selection:
    #  * default 512 (multiple of MXU M on v5e/v6e/v7x) to amortize grid overhead,
    #  * at least 2 grid steps when B > 128 so "parallel" lands on both v7x TCs,
    #  * tiny batches: one small tile rounded to 16 (bf16 sublane packing).
    tile_b = min(tile_b, max(_round_up(pl.cdiv(B, 2), 128), 128))
    tile_b = min(tile_b, _round_up(B, 16))

    Bp = _round_up(B, tile_b)
    sa = jnp.concatenate([state, action], axis=-1)       # fused layer-1 input
    if Bp != B:
        sa = jnp.pad(sa, ((0, Bp - B), (0, 0)))
    sa = sa.astype(jnp.bfloat16)                          # halves streamed-input DMA
    num_tiles = Bp // tile_b
    K = sa.shape[1]

    # Weights/biases: full-array blocks, block index always 0 -> VMEM-resident.
    resident = lambda shape: pl.BlockSpec(shape, lambda i: (0,) * len(shape))

    out = pl.pallas_call(
        _critic_kernel,
        out_shape=jax.ShapeDtypeStruct((num_tiles, 1, tile_b), jnp.float32),
        grid=(num_tiles,),
        in_specs=[
            pl.BlockSpec((tile_b, K), lambda i: (i, 0)),          # streamed activations
            resident(w1.shape),
            resident(b1.shape),
            resident(w2.shape),
            resident(b2.shape),
            resident(w3.shape),
            pl.BlockSpec(memory_space=pltpu.MemorySpace.SMEM),    # b3 scalar
        ],
        out_specs=pl.BlockSpec((1, 1, tile_b), lambda i: (i, 0, 0)),
        compiler_params=pltpu.CompilerParams(
            dimension_semantics=("parallel",),   # shard batch tiles across TCs (v7x)
        ),
    )(sa, w1, b1, w2, b2, w3, b3)

    return out.reshape(Bp)[:B].reshape(B, 1)


def init_critic_params(key, state_dim, action_dim):
    """PyTorch nn.Linear-style init (U(-1/sqrt(fan_in), +1/sqrt(fan_in))).

    Weights are stored transposed as (in, out) and cast to bf16; biases stay f32.
    The layer-3 weight is stored as a (1, 256) bf16 row used as the MXU LHS.
    """
    def linear(k, fan_in, fan_out):
        kw, kb = jax.random.split(k)
        bound = 1.0 / jnp.sqrt(jnp.float32(fan_in))
        w = jax.random.uniform(kw, (fan_in, fan_out), jnp.float32, -bound, bound)
        b = jax.random.uniform(kb, (1, fan_out), jnp.float32, -bound, bound)
        return w, b

    k1, k2, k3 = jax.random.split(key, 3)
    w1, b1 = linear(k1, state_dim + action_dim, 256)
    w2, b2 = linear(k2, 256, 256)
    w3, b3 = linear(k3, 256, 1)

    return (w1.astype(jnp.bfloat16), b1,
            w2.astype(jnp.bfloat16), b2,
            w3.T.astype(jnp.bfloat16),   # (1, 256) bf16 row
            b3)                          # (1, 1) f32 scalar -> SMEM


def critic_reference(state, action, params):
    """Pure-JAX reference mirroring the kernel's precision (bf16 in, f32 accum)."""
    w1, b1, w2, b2, w3, b3 = params
    sa = jnp.concatenate([state, action], axis=-1).astype(jnp.bfloat16)
    h1 = jnp.dot(sa, w1, preferred_element_type=jnp.float32) + b1
    h1 = jnp.maximum(h1, 0.0)
    h2 = jnp.dot(h1.astype(jnp.bfloat16), w2,
                 preferred_element_type=jnp.float32) + b2
    h2 = jnp.maximum(h2, 0.0)
    q = jnp.dot(h2.astype(jnp.bfloat16), w3.T,
                preferred_element_type=jnp.float32) + b3[0, 0]
    return q


if __name__ == "__main__":
    key = jax.random.PRNGKey(0)
    batch, state_dim, action_dim = 8, 17, 6

    k_params, k_state, k_action = jax.random.split(key, 3)
    params = init_critic_params(k_params, state_dim, action_dim)
    state = jax.random.normal(k_state, (batch, state_dim), jnp.float32)
    action = jax.random.normal(k_action, (batch, action_dim), jnp.float32)

    q = critic_forward(state, action, params)
    q = jax.block_until_ready(q)

    q_ref = critic_reference(state, action, params)
    assert q.shape == (batch, 1), q.shape
    err = float(jnp.max(jnp.abs(q - q_ref)))
    assert jnp.allclose(q, q_ref, atol=5e-3, rtol=5e-3), (
        f"mismatch vs JAX reference, max abs err = {err}")

    print("KERNEL_OK")
</pallas_src>

<mosaic_0001>
module attributes {stable_mosaic.version = 11 : i64} {
  func.func @_critic_kernel(%arg0: i32, %arg1: memref<16x23xbf16, #tpu.memory_space<vmem>>, %arg2: memref<23x256xbf16, #tpu.memory_space<vmem>>, %arg3: memref<1x256xf32, #tpu.memory_space<vmem>>, %arg4: memref<256x256xbf16, #tpu.memory_space<vmem>>, %arg5: memref<1x256xf32, #tpu.memory_space<vmem>>, %arg6: memref<1x256xbf16, #tpu.memory_space<vmem>>, %arg7: memref<1x1xf32, #tpu.memory_space<smem>>, %arg8: memref<1x1x16xf32, #tpu.memory_space<vmem>>) attributes {dimension_semantics = [#tpu.dimension_semantics<parallel>], iteration_bounds = array<i64: 1>, scalar_prefetch = 0 : i64, scratch_operands = 0 : i64, tpu.core_type = #tpu.core_type<tc>, window_params = [{transform_indices = @transform_0, window_bounds = array<i64: 16, 23>}, {pipeline_mode = #tpu.pipeline_mode<synchronous>, transform_indices = @transform_1, window_bounds = array<i64: 23, 256>}, {pipeline_mode = #tpu.pipeline_mode<synchronous>, transform_indices = @transform_2, window_bounds = array<i64: 1, 256>}, {pipeline_mode = #tpu.pipeline_mode<synchronous>, transform_indices = @transform_3, window_bounds = array<i64: 256, 256>}, {pipeline_mode = #tpu.pipeline_mode<synchronous>, transform_indices = @transform_4, window_bounds = array<i64: 1, 256>}, {pipeline_mode = #tpu.pipeline_mode<synchronous>, transform_indices = @transform_5, window_bounds = array<i64: 1, 256>}, {transform_indices = @transform_6, window_bounds = array<i64: 1, 1>}, {transform_indices = @transform_7, window_bounds = array<i64: 1, 1, 16>}]} {
    %c0 = arith.constant 0 : index
    %c0_0 = arith.constant 0 : index
    %0 = vector.load %arg1[%c0, %c0_0] : memref<16x23xbf16, #tpu.memory_space<vmem>>, vector<16x23xbf16>
    %c0_1 = arith.constant 0 : index
    %c0_2 = arith.constant 0 : index
    %1 = vector.load %arg2[%c0_1, %c0_2] : memref<23x256xbf16, #tpu.memory_space<vmem>>, vector<23x256xbf16>
    %cst = arith.constant dense<0.000000e+00> : vector<16x256xf32>
    %2 = tpu.matmul %0, %1, %cst {dimension_numbers = #tpu.dot_dimension_numbers<[1], [0], [0], [1], [0, 0, 1, 1], [], []>} : vector<16x23xbf16>, vector<23x256xbf16>, vector<16x256xf32> -> vector<16x256xf32>
    %c0_3 = arith.constant 0 : index
    %c0_4 = arith.constant 0 : index
    %3 = vector.load %arg3[%c0_3, %c0_4] : memref<1x256xf32, #tpu.memory_space<vmem>>, vector<1x256xf32>
    %4 = vector.broadcast %3 : vector<1x256xf32> to vector<16x256xf32>
    %5 = arith.addf %2, %4 : vector<16x256xf32>
    %cst_5 = arith.constant 0.000000e+00 : f32
    %6 = vector.broadcast %cst_5 : f32 to vector<16x256xf32>
    %7 = arith.maximumf %5, %6 : vector<16x256xf32>
    %8 = arith.truncf %7 : vector<16x256xf32> to vector<16x256xbf16>
    %c0_6 = arith.constant 0 : index
    %c0_7 = arith.constant 0 : index
    %9 = vector.load %arg4[%c0_6, %c0_7] : memref<256x256xbf16, #tpu.memory_space<vmem>>, vector<256x256xbf16>
    %cst_8 = arith.constant dense<0.000000e+00> : vector<16x256xf32>
    %10 = tpu.matmul %8, %9, %cst_8 {dimension_numbers = #tpu.dot_dimension_numbers<[1], [0], [0], [1], [0, 0, 1, 1], [], []>} : vector<16x256xbf16>, vector<256x256xbf16>, vector<16x256xf32> -> vector<16x256xf32>
    %c0_9 = arith.constant 0 : index
    %c0_10 = arith.constant 0 : index
    %11 = vector.load %arg5[%c0_9, %c0_10] : memref<1x256xf32, #tpu.memory_space<vmem>>, vector<1x256xf32>
    %12 = vector.broadcast %11 : vector<1x256xf32> to vector<16x256xf32>
    %13 = arith.addf %10, %12 : vector<16x256xf32>
    %cst_11 = arith.constant 0.000000e+00 : f32
    %14 = vector.broadcast %cst_11 : f32 to vector<16x256xf32>
    %15 = arith.maximumf %13, %14 : vector<16x256xf32>
    %c0_12 = arith.constant 0 : index
    %c0_13 = arith.constant 0 : index
    %16 = vector.load %arg6[%c0_12, %c0_13] : memref<1x256xbf16, #tpu.memory_space<vmem>>, vector<1x256xbf16>
    %17 = arith.truncf %15 : vector<16x256xf32> to vector<16x256xbf16>
    %cst_14 = arith.constant dense<0.000000e+00> : vector<1x16xf32>
    %18 = tpu.matmul %16, %17, %cst_14 {dimension_numbers = #tpu.dot_dimension_numbers<[1], [1], [0], [0], [0, 0, 1, 0], [], []>} : vector<1x256xbf16>, vector<16x256xbf16>, vector<1x16xf32> -> vector<1x16xf32>
    %c0_15 = arith.constant 0 : index
    %c0_16 = arith.constant 0 : index
    %19 = memref.load %arg7[%c0_15, %c0_16] : memref<1x1xf32, #tpu.memory_space<smem>>
    %20 = vector.broadcast %19 : f32 to vector<1x16xf32>
    %21 = arith.addf %18, %20 : vector<1x16xf32>
    %22 = vector.shape_cast %21 : vector<1x16xf32> to vector<1x1x16xf32>
    %c0_17 = arith.constant 0 : index
    %c0_18 = arith.constant 0 : index
    %c0_19 = arith.constant 0 : index
    %23 = vector.load %arg8[%c0_17, %c0_18, %c0_19] : memref<1x1x16xf32, #tpu.memory_space<vmem>>, vector<1x1x16xf32>
    tpu.vector_store %arg8[%c0_17, %c0_18, %c0_19], %22 {strides = array<i32>} : memref<1x1x16xf32, #tpu.memory_space<vmem>>, vector<1x1x16xf32>,
    return
  }
  func.func @transform_0(%arg0: i32) -> (i32, i32) {
    %c0_i32 = arith.constant 0 : i32
    %c0_i32_0 = arith.constant 0 : i32
    return %arg0, %c0_i32 : i32, i32
  }
  func.func @transform_1(%arg0: i32) -> (i32, i32) {
    %c0_i32 = arith.constant 0 : i32
    %c0_i32_0 = arith.constant 0 : i32
    %c0_i32_1 = arith.constant 0 : i32
    return %c0_i32, %c0_i32_0 : i32, i32
  }
  func.func @transform_2(%arg0: i32) -> (i32, i32) {
    %c0_i32 = arith.constant 0 : i32
    %c0_i32_0 = arith.constant 0 : i32
    %c0_i32_1 = arith.constant 0 : i32
    return %c0_i32, %c0_i32_0 : i32, i32
  }
  func.func @transform_3(%arg0: i32) -> (i32, i32) {
    %c0_i32 = arith.constant 0 : i32
    %c0_i32_0 = arith.constant 0 : i32
    %c0_i32_1 = arith.constant 0 : i32
    return %c0_i32, %c0_i32_0 : i32, i32
  }
  func.func @transform_4(%arg0: i32) -> (i32, i32) {
    %c0_i32 = arith.constant 0 : i32
    %c0_i32_0 = arith.constant 0 : i32
    %c0_i32_1 = arith.constant 0 : i32
    return %c0_i32, %c0_i32_0 : i32, i32
  }
  func.func @transform_5(%arg0: i32) -> (i32, i32) {
    %c0_i32 = arith.constant 0 : i32
    %c0_i32_0 = arith.constant 0 : i32
    %c0_i32_1 = arith.constant 0 : i32
    return %c0_i32, %c0_i32_0 : i32, i32
  }
  func.func @transform_6(%arg0: i32) -> (i32, i32) {
    %c0_i32 = arith.constant 0 : i32
    %c0_i32_0 = arith.constant 0 : i32
    %c0_i32_1 = arith.constant 0 : i32
    return %c0_i32, %c0_i32_0 : i32, i32
  }
  func.func @transform_7(%arg0: i32) -> (i32, i32, i32) {
    %c0_i32 = arith.constant 0 : i32
    %c0_i32_0 = arith.constant 0 : i32
    %c0_i32_1 = arith.constant 0 : i32
    return %arg0, %c0_i32, %c0_i32_0 : i32, i32, i32
  }
}

</mosaic_0001>

<llo_original>
// kernel: tpu_custom_call.1
$region0: #{tpu_custom_call.1}
  #allocation0 [shape = 'u32[]', space=smem, size = 0x4, offset = 0x4, fixed_abs, tag = 'smem constant byte address 0x4 - core index']
  #allocation1 [shape = 'u32[144,128]{1,0:T(1,128)}', space=vmem, size = 0x12000, scoped, tag = 'internal scratch']
  #allocation2 [shape = 'f32[1,1]{1,0:T(1,128)S(6)}', space=smem, size = 0x200, scoped, tag = 'scoped memory for tpu_custom_call.1']
  %s0 = inlined_call_operand.hbm [shape: bf16[16,23], index: 0, kind: input, shape index: {}]
  %s1 = inlined_call_operand.hbm [shape: bf16[23,256], index: 1, kind: input, shape index: {}]
  %s2 = inlined_call_operand.vmem [shape: f32[1,256], index: 2, kind: input, shape index: {}]
  %s3 = inlined_call_operand.hbm [shape: bf16[256,256], index: 3, kind: input, shape index: {}]
  %s4 = inlined_call_operand.vmem [shape: f32[1,256], index: 4, kind: input, shape index: {}]
  %s5 = inlined_call_operand.vmem [shape: bf16[1,256], index: 5, kind: input, shape index: {}]
  %s6 = inlined_call_operand.<no memory space> [shape: f32[1,1], index: 6, kind: input, shape index: {}]
  %s7 = inlined_call_operand.hbm [shape: f32[1,1,16], index: 7, kind: output, shape index: {}]
  %s8 = sld [smem:[#allocation0]]
  $region50: #{tpu_custom_call.1} parent=0
    _
  %s10 = ssub.s32 1, %s8
  %s11 = scalar_select 0, %s10, %s8
  %12 = sst [smem:[#allocation2]] %s6
  $region1: #{tpu_custom_call.1} parent=0
    #allocation3 [shape = 'u8[4096]{0}', space=vmem, size = 0x1000, scoped, tag = 'input window, operand 0, single buffered']
    #allocation4 [shape = 's32[1]{0}', space=sflag, size = 0x4, scoped, tag = 'scoped memory for tpu_custom_call.1']
    #allocation5 [shape = 's32[1]{0}', space=sflag, size = 0x4, scoped, tag = 'scoped memory for tpu_custom_call.1']
    #allocation6 [shape = 'u8[12288]{0}', space=vmem, size = 0x3000, scoped, tag = 'input window, operand 1, single buffered']
    #allocation7 [shape = 's32[1]{0}', space=sflag, size = 0x4, scoped, tag = 'scoped memory for tpu_custom_call.1']
    #allocation8 [shape = 'u8[131072]{0}', space=vmem, size = 0x20000, scoped, tag = 'input window, operand 3, single buffered']
    #allocation9 [shape = 'u8[512]{0}', space=vmem, size = 0x400, scoped, tag = 'output window, operand 0, single buffered']
    %13 = vsyncpa [#allocation4], 0
    %14 = vsyncpa [#allocation7], 0
    %15 = vsyncpa [#allocation5], 0
    // Predicated region
    $region2: #{tpu_custom_call.1} parent=1 // pred_check
      _
    $region3: #{tpu_custom_call.1} parent=1 // pred_check_branch
      %17 = sbr.rel (0) target = $region5
    $region4: #{tpu_custom_call.1} parent=1 // pred_region
      %s19 = ssub.s32 128, 128
      %20 = vsyncadd [#allocation4], %s19
      %s21 = sshll.u32 [#allocation3], 4
      %s22 = int_to_ptr.vmem [resolvable:$true] %s21
      %27 = dma.hbm_to_vmem [thread:$0]  %s0, 128, %s22, [#allocation4], 64, 64, 4
    $region5: #{tpu_custom_call.1} parent=1 // pred_fallthru
      _
    // Predicated region
    $region6: #{tpu_custom_call.1} parent=1 // pred_check
      _
    $region7: #{tpu_custom_call.1} parent=1 // pred_check_branch
      %29 = sbr.rel (0) target = $region9
    $region8: #{tpu_custom_call.1} parent=1 // pred_region
      %s31 = ssub.s32 384, 384
      %32 = vsyncadd [#allocation7], %s31
      %s33 = sshll.u32 [#allocation6], 4
      %s34 = int_to_ptr.vmem [resolvable:$true] %s33
      %39 = dma.hbm_to_vmem [thread:$0]  %s1, 384, %s34, [#allocation7], 128, 128, 8
    $region9: #{tpu_custom_call.1} parent=1 // pred_fallthru
      _
    // Predicated region
    $region10: #{tpu_custom_call.1} parent=1 // pred_check
      _
    $region11: #{tpu_custom_call.1} parent=1 // pred_check_branch
      %41 = sbr.rel (0) target = $region13
    $region12: #{tpu_custom_call.1} parent=1 // pred_region
      _
    $region13: #{tpu_custom_call.1} parent=1 // pred_fallthru
      _
    // Predicated region
    $region14: #{tpu_custom_call.1} parent=1 // pred_check
      _
    $region15: #{tpu_custom_call.1} parent=1 // pred_check_branch
      %43 = sbr.rel (0) target = $region17
    $region16: #{tpu_custom_call.1} parent=1 // pred_region
      %s45 = ssub.s32 4096, 4096
      %46 = vsyncadd [#allocation7], %s45
      %s47 = sshll.u32 [#allocation8], 4
      %s48 = int_to_ptr.vmem [resolvable:$true] %s47
      %53 = dma.hbm_to_vmem [thread:$0]  %s3, 4096, %s48, [#allocation7], 128, 128, 8
    $region17: #{tpu_custom_call.1} parent=1 // pred_fallthru
      _
    // Predicated region
    $region18: #{tpu_custom_call.1} parent=1 // pred_check
      _
    $region19: #{tpu_custom_call.1} parent=1 // pred_check_branch
      %55 = sbr.rel (0) target = $region21
    $region20: #{tpu_custom_call.1} parent=1 // pred_region
      _
    $region21: #{tpu_custom_call.1} parent=1 // pred_fallthru
      _
    // Predicated region
    $region22: #{tpu_custom_call.1} parent=1 // pred_check
      _
    $region23: #{tpu_custom_call.1} parent=1 // pred_check_branch
      %57 = sbr.rel (0) target = $region25
    $region24: #{tpu_custom_call.1} parent=1 // pred_region
      _
    $region25: #{tpu_custom_call.1} parent=1 // pred_fallthru
      _
    // Predicated region
    $region26: #{tpu_custom_call.1} parent=1 // pred_check
      _
    $region27: #{tpu_custom_call.1} parent=1 // pred_check_branch
      %59 = sbr.rel (0) target = $region29
    $region28: #{tpu_custom_call.1} parent=1 // pred_region
      _
    $region29: #{tpu_custom_call.1} parent=1 // pred_fallthru
      _
    // Predicated region
    $region30: #{tpu_custom_call.1} parent=1 // pred_check
      _
    $region31: #{tpu_custom_call.1} parent=1 // pred_check_branch
      %61 = sbr.rel (0) target = $region33
    $region32: #{tpu_custom_call.1} parent=1 // pred_region
      %62 = dma.done [#allocation4], 128
    $region33: #{tpu_custom_call.1} parent=1 // pred_fallthru
      _
    // Predicated region
    $region34: #{tpu_custom_call.1} parent=1 // pred_check
      _
    $region35: #{tpu_custom_call.1} parent=1 // pred_check_branch
      %64 = sbr.rel (0) target = $region37
    $region36: #{tpu_custom_call.1} parent=1 // pred_region
      %65 = dma.done [#allocation7], 384
    $region37: #{tpu_custom_call.1} parent=1 // pred_fallthru
      _
    // Predicated region
    $region38: #{tpu_custom_call.1} parent=1 // pred_check
      _
    $region39: #{tpu_custom_call.1} parent=1 // pred_check_branch
      %67 = sbr.rel (0) target = $region41
    $region40: #{tpu_custom_call.1} parent=1 // pred_region
      %68 = dma.done [#allocation7], 4096
    $region41: #{tpu_custom_call.1} parent=1 // pred_fallthru
      _
    %v70 = vld [vmem:[#allocation3] sm:$0xf]
    %v71 = vld [vmem:[#allocation3 + $0x4] sm:$0xf]
    %v72 = vld [vmem:[#allocation6] sm:$0xff]
    %v73 = vld [vmem:[#allocation6 + $0x8] sm:$0xff]
    %v74 = vld [vmem:[#allocation6 + $0x10] sm:$0xff]
    %v75 = vld [vmem:[%s2] sm:$0x3]
    %v77 = vlaneseq
    %v78 = vshrl.u32 %v77, 7
    %v79 = vsub.s32 0, %v78
    %v80 = vrot.slane %v75, %v79
    %v81 = vlaneseq
    %v82 = vshrl.u32 %v81, 7
    %v83 = vsub.s32 1, %v82
    %v84 = vrot.slane %v75, %v83
    %v89 = vunpack.c.l.b16 %v70
    %v90 = vunpack.c.l.b16 %v71
    %v91 = vpack.c.b16 %v90, %v89
    %v95 = vunpack.c.l.b16 %v72
    %v96 = vunpack.c.h.b16 %v72
    %v97 = vunpack.c.l.b16 %v73
    %v98 = vunpack.c.h.b16 %v73
    %v99 = vunpack.c.l.b16 %v74
    %v100 = vunpack.c.h.b16 %v74
    %v101 = vpack.c.b16 %v97, %v95
    %v102 = vpack.c.b16 %v98, %v96
    %v103 = vpack.c.b16 %v99, %v99
    %v104 = vpack.c.b16 %v100, %v100
    %vm107 = vcmask 187392
    %v109 = vsel %vm107, %v91, 0
    %vm111 = vcmask 1042432
    %vm112 = vcmask 1043456
    %v113 = vsel %vm111, 4294967295, 65535
    %v114 = vsel %vm112, %v113, 0
    %v116 = vand.u32 %v103, %v114
    %v119 = vand.u32 %v104, %v114
    %121 = vmatprep.subr.bf16.mxu0 %v102
    %122 = vmatpush1.bf16.msra.mxu0 %v101
    %123 = vmatprep.subr.bf16.mxu0 %v119
    %124 = vmatpush1.bf16.msra.mxu0 %v116
    %125 = vmatprep.subr.bf16.mxu0 0
    %126 = vmatpush1.bf16.msra.mxu0 0
    %127 = vmatprep.subr.bf16.mxu0 0
    %128 = vmatpush1.bf16.msra.mxu0 0
    %129 = vmatprep.subr.bf16.mxu0 0
    %130 = vmatpush1.bf16.msra.mxu0 0
    %131 = vmatprep.subr.bf16.mxu0 0
    %132 = vmatpush1.bf16.msra.mxu0 0
    %133 = vmatprep.subr.bf16.mxu0 0
    %134 = vmatpush1.bf16.msra.mxu0 0
    %135 = vmatprep.subr.bf16.mxu0 0
    %136 = vmatpush1.bf16.msra.mxu0 0
    %137 = vmatprep.subr.bf16.mxu0 0
    %138 = vmatpush1.bf16.msra.mxu0 0
    %139 = vmatprep.subr.bf16.mxu0 0
    %140 = vmatpush1.bf16.msra.mxu0 0
    %141 = vmatprep.subr.bf16.mxu0 0
    %142 = vmatpush1.bf16.msra.mxu0 0
    %143 = vmatprep.subr.bf16.mxu0 0
    %144 = vmatpush1.bf16.msra.mxu0 0
    %145 = vmatprep.subr.bf16.mxu0 0
    %146 = vmatpush1.bf16.msra.mxu0 0
    %147 = vmatprep.subr.bf16.mxu0 0
    %148 = vmatpush1.bf16.msra.mxu0 0
    %149 = vmatprep.subr.bf16.mxu0 0
    %150 = vmatpush1.bf16.msra.mxu0 0
    %151 = vmatprep.subr.bf16.mxu0 0
    %152 = vmatpush1.bf16.msra.mxu0 0
    %153 = vmatprep.mubr.bf16.mxu0 0
    %154 = vmatmul.mubr.bf16.gmra.mrb[0].mxu0 %v109
    %v155 = vpop.f32.mrb[0].mxu0
    %v156 = vadd.f32 %v80, %v155
    %v157 = vpop.f32.mrb[0].mxu0
    %v158 = vadd.f32 %v84, %v157
    %v159 = vpop.f32.mrb[0].mxu0
    %v160 = vadd.f32 %v80, %v159
    %v161 = vpop.f32.mrb[0].mxu0
    %v162 = vadd.f32 %v84, %v161
    %163 = vdwg.mxu0
    %v164 = vmax.f32 %v156, 0.0
    %v165 = vmax.f32 %v158, 0.0
    %v166 = vmax.f32 %v160, 0.0
    %v167 = vmax.f32 %v162, 0.0
    %v168 = vpack.c.bf16 %v166, %v164
    %v169 = vpack.c.bf16 %v167, %v165
    %v170 = vld [vmem:[#allocation8] sm:$0xff]
    %v171 = vld [vmem:[#allocation8 + $0x8] sm:$0xff]
    %v172 = vld [vmem:[#allocation8 + $0x10] sm:$0xff]
    %v173 = vld [vmem:[#allocation8 + $0x18] sm:$0xff]
    %v174 = vld [vmem:[#allocation8 + $0x20] sm:$0xff]
    %v175 = vld [vmem:[#allocation8 + $0x28] sm:$0xff]
    %v176 = vld [vmem:[#allocation8 + $0x30] sm:$0xff]
    %v177 = vld [vmem:[#allocation8 + $0x38] sm:$0xff]
    %v178 = vld [vmem:[#allocation8 + $0x40] sm:$0xff]
    %v179 = vld [vmem:[#allocation8 + $0x48] sm:$0xff]
    %v180 = vld [vmem:[#allocation8 + $0x50] sm:$0xff]
    %v181 = vld [vmem:[#allocation8 + $0x58] sm:$0xff]
    %v182 = vld [vmem:[#allocation8 + $0x60] sm:$0xff]
    %v183 = vld [vmem:[#allocation8 + $0x68] sm:$0xff]
    %v184 = vld [vmem:[#allocation8 + $0x70] sm:$0xff]
    %v185 = vld [vmem:[#allocation8 + $0x78] sm:$0xff]
    %v186 = vld [vmem:[#allocation8 + $0x80] sm:$0xff]
    %v187 = vld [vmem:[#allocation8 + $0x88] sm:$0xff]
    %v188 = vld [vmem:[#allocation8 + $0x90] sm:$0xff]
    %v189 = vld [vmem:[#allocation8 + $0x98] sm:$0xff]
    %v190 = vld [vmem:[#allocation8 + $0xa0] sm:$0xff]
    %v191 = vld [vmem:[#allocation8 + $0xa8] sm:$0xff]
    %v192 = vld [vmem:[#allocation8 + $0xb0] sm:$0xff]
    %v193 = vld [vmem:[#allocation8 + $0xb8] sm:$0xff]
    %v194 = vld [vmem:[#allocation8 + $0xc0] sm:$0xff]
    %v195 = vld [vmem:[#allocation8 + $0xc8] sm:$0xff]
    %v196 = vld [vmem:[#allocation8 + $0xd0] sm:$0xff]
    %v197 = vld [vmem:[#allocation8 + $0xd8] sm:$0xff]
    %v198 = vld [vmem:[#allocation8 + $0xe0] sm:$0xff]
    %v199 = vld [vmem:[#allocation8 + $0xe8] sm:$0xff]
    %v200 = vld [vmem:[#allocation8 + $0xf0] sm:$0xff]
    %v201 = vld [vmem:[#allocation8 + $0xf8] sm:$0xff]
    %v202 = vld [vmem:[%s4] sm:$0x3]
    %v204 = vlaneseq
    %v205 = vshrl.u32 %v204, 7
    %v206 = vsub.s32 0, %v205
    %v207 = vrot.slane %v202, %v206
    %v208 = vlaneseq
    %v209 = vshrl.u32 %v208, 7
    %v210 = vsub.s32 1, %v209
    %v211 = vrot.slane %v202, %v210
    %v246 = vunpack.c.l.b16 %v170
    %v247 = vunpack.c.h.b16 %v170
    %v248 = vunpack.c.l.b16 %v171
    %v249 = vunpack.c.h.b16 %v171
    %v250 = vunpack.c.l.b16 %v172
    %v251 = vunpack.c.h.b16 %v172
    %v252 = vunpack.c.l.b16 %v173
    %v253 = vunpack.c.h.b16 %v173
    %v254 = vunpack.c.l.b16 %v174
    %v255 = vunpack.c.h.b16 %v174
    %v256 = vunpack.c.l.b16 %v175
    %v257 = vunpack.c.h.b16 %v175
    %v258 = vunpack.c.l.b16 %v176
    %v259 = vunpack.c.h.b16 %v176
    %v260 = vunpack.c.l.b16 %v177
    %v261 = vunpack.c.h.b16 %v177
    %v262 = vunpack.c.l.b16 %v178
    %v263 = vunpack.c.h.b16 %v178
    %v264 = vunpack.c.l.b16 %v179
    %v265 = vunpack.c.h.b16 %v179
    %v266 = vunpack.c.l.b16 %v180
    %v267 = vunpack.c.h.b16 %v180
    %v268 = vunpack.c.l.b16 %v181
    %v269 = vunpack.c.h.b16 %v181
    %v270 = vunpack.c.l.b16 %v182
    %v271 = vunpack.c.h.b16 %v182
    %v272 = vunpack.c.l.b16 %v183
    %v273 = vunpack.c.h.b16 %v183
    %v274 = vunpack.c.l.b16 %v184
    %v275 = vunpack.c.h.b16 %v184
    %v276 = vunpack.c.l.b16 %v185
    %v277 = vunpack.c.h.b16 %v185
    %v278 = vunpack.c.l.b16 %v186
    %v279 = vunpack.c.h.b16 %v186
    %v280 = vunpack.c.l.b16 %v187
    %v281 = vunpack.c.h.b16 %v187
    %v282 = vunpack.c.l.b16 %v188
    %v283 = vunpack.c.h.b16 %v188
    %v284 = vunpack.c.l.b16 %v189
    %v285 = vunpack.c.h.b16 %v189
    %v286 = vunpack.c.l.b16 %v190
    %v287 = vunpack.c.h.b16 %v190
    %v288 = vunpack.c.l.b16 %v191
    %v289 = vunpack.c.h.b16 %v191
    %v290 = vunpack.c.l.b16 %v192
    %v291 = vunpack.c.h.b16 %v192
    %v292 = vunpack.c.l.b16 %v193
    %v293 = vunpack.c.h.b16 %v193
    %v294 = vunpack.c.l.b16 %v194
    %v295 = vunpack.c.h.b16 %v194
    %v296 = vunpack.c.l.b16 %v195
    %v297 = vunpack.c.h.b16 %v195
    %v298 = vunpack.c.l.b16 %v196
    %v299 = vunpack.c.h.b16 %v196
    %v300 = vunpack.c.l.b16 %v197
    %v301 = vunpack.c.h.b16 %v197
    %v302 = vunpack.c.l.b16 %v198
    %v303 = vunpack.c.h.b16 %v198
    %v304 = vunpack.c.l.b16 %v199
    %v305 = vunpack.c.h.b16 %v199
    %v306 = vunpack.c.l.b16 %v200
    %v307 = vunpack.c.h.b16 %v200
    %v308 = vunpack.c.l.b16 %v201
    %v309 = vunpack.c.h.b16 %v201
    %v310 = vpack.c.b16 %v248, %v246
    %v311 = vpack.c.b16 %v249, %v247
    %v312 = vpack.c.b16 %v252, %v250
    %v313 = vpack.c.b16 %v253, %v251
    %v314 = vpack.c.b16 %v256, %v254
    %v315 = vpack.c.b16 %v257, %v255
    %v316 = vpack.c.b16 %v260, %v258
    %v317 = vpack.c.b16 %v261, %v259
    %v318 = vpack.c.b16 %v264, %v262
    %v319 = vpack.c.b16 %v265, %v263
    %v320 = vpack.c.b16 %v268, %v266
    %v321 = vpack.c.b16 %v269, %v267
    %v322 = vpack.c.b16 %v272, %v270
    %v323 = vpack.c.b16 %v273, %v271
    %v324 = vpack.c.b16 %v276, %v274
    %v325 = vpack.c.b16 %v277, %v275
    %v326 = vpack.c.b16 %v280, %v278
    %v327 = vpack.c.b16 %v281, %v279
    %v328 = vpack.c.b16 %v284, %v282
    %v329 = vpack.c.b16 %v285, %v283
    %v330 = vpack.c.b16 %v288, %v286
    %v331 = vpack.c.b16 %v289, %v287
    %v332 = vpack.c.b16 %v292, %v290
    %v333 = vpack.c.b16 %v293, %v291
    %v334 = vpack.c.b16 %v296, %v294
    %v335 = vpack.c.b16 %v297, %v295
    %v336 = vpack.c.b16 %v300, %v298
    %v337 = vpack.c.b16 %v301, %v299
    %v338 = vpack.c.b16 %v304, %v302
    %v339 = vpack.c.b16 %v305, %v303
    %v340 = vpack.c.b16 %v308, %v306
    %v341 = vpack.c.b16 %v309, %v307
    %374 = vmatprep.subr.bf16.mxu0 %v311
    %375 = vmatpush1.bf16.msra.mxu0 %v310
    %376 = vmatprep.subr.bf16.mxu0 %v313
    %377 = vmatpush1.bf16.msra.mxu0 %v312
    %378 = vmatprep.subr.bf16.mxu0 %v315
    %379 = vmatpush1.bf16.msra.mxu0 %v314
    %380 = vmatprep.subr.bf16.mxu0 %v317
    %381 = vmatpush1.bf16.msra.mxu0 %v316
    %382 = vmatprep.subr.bf16.mxu0 %v319
    %383 = vmatpush1.bf16.msra.mxu0 %v318
    %384 = vmatprep.subr.bf16.mxu0 %v321
    %385 = vmatpush1.bf16.msra.mxu0 %v320
    %386 = vmatprep.subr.bf16.mxu0 %v323
    %387 = vmatpush1.bf16.msra.mxu0 %v322
    %388 = vmatprep.subr.bf16.mxu0 %v325
    %389 = vmatpush1.bf16.msra.mxu0 %v324
    %390 = vmatprep.subr.bf16.mxu0 %v327
    %391 = vmatpush1.bf16.msra.mxu0 %v326
    %392 = vmatprep.subr.bf16.mxu0 %v329
    %393 = vmatpush1.bf16.msra.mxu0 %v328
    %394 = vmatprep.subr.bf16.mxu0 %v331
    %395 = vmatpush1.bf16.msra.mxu0 %v330
    %396 = vmatprep.subr.bf16.mxu0 %v333
    %397 = vmatpush1.bf16.msra.mxu0 %v332
    %398 = vmatprep.subr.bf16.mxu0 %v335
    %399 = vmatpush1.bf16.msra.mxu0 %v334
    %400 = vmatprep.subr.bf16.mxu0 %v337
    %401 = vmatpush1.bf16.msra.mxu0 %v336
    %402 = vmatprep.subr.bf16.mxu0 %v339
    %403 = vmatpush1.bf16.msra.mxu0 %v338
    %404 = vmatprep.subr.bf16.mxu0 %v341
    %405 = vmatpush1.bf16.msra.mxu0 %v340
    %406 = vmatprep.mubr.bf16.mxu0 %v169
    %407 = vmatmul.mubr.bf16.gmra.mrb[0].mxu0 %v168
    %v408 = vpop.f32.mrb[0].mxu0
    %v409 = vadd.f32 %v207, %v408
    %v410 = vpop.f32.mrb[0].mxu0
    %v411 = vadd.f32 %v211, %v410
    %v412 = vpop.f32.mrb[0].mxu0
    %v413 = vadd.f32 %v207, %v412
    %v414 = vpop.f32.mrb[0].mxu0
    %v415 = vadd.f32 %v211, %v414
    %416 = vdwg.mxu0
    %v417 = vmax.f32 %v409, 0.0
    %v418 = vmax.f32 %v411, 0.0
    %v419 = vmax.f32 %v413, 0.0
    %v420 = vmax.f32 %v415, 0.0
    %v421 = vld [vmem:[%s5] sm:$0x3]
    %v422 = vpack.c.bf16 %v419, %v417
    %v423 = vpack.c.bf16 %v420, %v418
    %s424 = sld [smem:[#allocation2]]
    %v425 = vstv %s424
    %v428 = vunpack.c.l.s4 1966171168
    %v429 = vunpack.c.0.s8 %v428
    %v430 = vlaneseq
    %v431 = vshrl.u32 %v430, 7
    %v432 = vsub.s32 %v429, %v431
    %v433 = vrot.slane %v421, %v432
    %v434 = vcombine.high %v433, %v433
    %v436 = vunpack.c.l.s4 1966171168
    %v437 = vunpack.c.0.s8 %v436
    %v438 = vlaneseq
    %v439 = vshrl.u32 %v438, 7
    %v440 = vsub.s32 %v437, %v439
    %v441 = vrot.slane %v433, %v440
    %v443 = vunpack.c.l.s4 1966171168
    %v444 = vunpack.c.0.s8 %v443
    %v445 = vlaneseq
    %v446 = vshrl.u32 %v445, 7
    %v447 = vsub.s32 %v444, %v446
    %v448 = vrot.slane %v434, %v447
    %451 = vmatprep.subr.bf16.mxu0 %v423
    %452 = vmatpush1.bf16.xpose.msra.mxu0 %v422
    %453 = vmatprep.subr.bf16.mxu0 0
    %454 = vmatpush1.bf16.xpose.msra.mxu0 0
    %455 = vmatprep.subr.bf16.mxu0 0
    %456 = vmatpush1.bf16.xpose.msra.mxu0 0
    %457 = vmatprep.subr.bf16.mxu0 0
    %458 = vmatpush1.bf16.xpose.msra.mxu0 0
    %459 = vmatprep.subr.bf16.mxu0 0
    %460 = vmatpush1.bf16.xpose.msra.mxu0 0
    %461 = vmatprep.subr.bf16.mxu0 0
    %462 = vmatpush1.bf16.xpose.msra.mxu0 0
    %463 = vmatprep.subr.bf16.mxu0 0
    %464 = vmatpush1.bf16.xpose.msra.mxu0 0
    %465 = vmatprep.subr.bf16.mxu0 0
    %466 = vmatpush1.bf16.xpose.msra.mxu0 0
    %467 = vmatprep.subr.bf16.mxu0 0
    %468 = vmatpush1.bf16.xpose.msra.mxu0 0
    %469 = vmatprep.subr.bf16.mxu0 0
    %470 = vmatpush1.bf16.xpose.msra.mxu0 0
    %471 = vmatprep.subr.bf16.mxu0 0
    %472 = vmatpush1.bf16.xpose.msra.mxu0 0
    %473 = vmatprep.subr.bf16.mxu0 0
    %474 = vmatpush1.bf16.xpose.msra.mxu0 0
    %475 = vmatprep.subr.bf16.mxu0 0
    %476 = vmatpush1.bf16.xpose.msra.mxu0 0
    %477 = vmatprep.subr.bf16.mxu0 0
    %478 = vmatpush1.bf16.xpose.msra.mxu0 0
    %479 = vmatprep.subr.bf16.mxu0 0
    %480 = vmatpush1.bf16.xpose.msra.mxu0 0
    %481 = vmatprep.subr.bf16.mxu0 0
    %482 = vmatpush1.bf16.xpose.msra.mxu0 0
    %483 = vmatprep.mubr.bf16.mxu0 %v448
    %484 = vmatmul.mubr.bf16.gmra.mrb[0].mxu0 %v441
    %v485 = vpop.f32.mrb[0].mxu0
    %v486 = vadd.f32 %v425, %v485
    %v487 = vpop.f32.mrb[0].mxu0
    %v488 = vpop.f32.mrb[0].mxu0
    %v489 = vpop.f32.mrb[0].mxu0
    %490 = vdwg.mxu0
    %vm491 = vcmask 122880
    %492 = vst.msk [vmem:[#allocation9] sm:$0x1] %vm491, %v486
    // Predicated region
    $region42: #{tpu_custom_call.1} parent=1 // pred_check
      _
    $region43: #{tpu_custom_call.1} parent=1 // pred_check_branch
      %494 = sbr.rel (0) target = $region45
    $region44: #{tpu_custom_call.1} parent=1 // pred_region
      %s496 = ssub.s32 16, 16
      %497 = vsyncadd [#allocation5], %s496
      %s499 = sshll.u32 [#allocation9], 4
      %s500 = int_to_ptr.vmem [resolvable:$true] %s499
      %502 = dma.vmem_to_hbm [thread:$0]  %s500, 16, %s7, [#allocation5]
    $region45: #{tpu_custom_call.1} parent=1 // pred_fallthru
      _
    // Predicated region
    $region46: #{tpu_custom_call.1} parent=1 // pred_check
      _
    $region47: #{tpu_custom_call.1} parent=1 // pred_check_branch
      %504 = sbr.rel (0) target = $region49
    $region48: #{tpu_custom_call.1} parent=1 // pred_region
      %505 = dma.done [#allocation5], 16
    $region49: #{tpu_custom_call.1} parent=1 // pred_fallthru
      _
    %506 = vsyncpa [#allocation4], 1
    %507 = vsyncpa [#allocation7], 1
    %508 = vsyncpa [#allocation5], 1

</llo_original>
